<compile_context>
chip_gen: v7x
topology: tpu7x:2x2x1
jax: 0.10.0
libtpu: 0.0.40
codegen_flags: <defaults>
</compile_context>

<pallas_src>
import jax
import jax.numpy as jnp
from jax import lax
from jax.experimental import pallas as pl
from jax.experimental.pallas import tpu as pltpu

EPS = 1e-8
_LANE = 128
_SUBLANE = 8
# Below this many elements a pallas_call is pure launch overhead; let XLA fuse it.
_XLA_FALLBACK_ELEMS = 16384


def _round_up(a, b):
    return (a + b - 1) // b * b


def _feddecorr_reference(x):
    """Pure-JAX mirror of the PyTorch module (also tiny-problem / huge-C fallback)."""
    x = x.astype(jnp.float32)
    n, c = x.shape
    x = x - jnp.mean(x, axis=0, keepdims=True)
    var = jnp.var(x, axis=0, keepdims=True, ddof=1)
    x = x / jnp.sqrt(EPS + var)
    corr = jnp.dot(x.T, x, precision=lax.Precision.HIGHEST)
    off = corr - jnp.diag(jnp.diag(corr))
    return (jnp.sum(off * off) / (c * c - c)) / n


def _vmem_budget_bytes():
    """~75% of this generation's VMEM (leaves headroom for Mosaic scratch)."""
    try:
        cap = int(pltpu.get_tpu_info().vmem_capacity_bytes)
    except Exception:
        cap = 64 << 20          # v7x-safe fallback if the query is unavailable
    return int(cap * 0.75)


def _make_kernel(n_true, tile_n, steps_per_split, compute_dtype):
    def kernel(x_ref, g_ref, s_ref):
        split = pl.program_id(0)
        k = pl.program_id(1)

        @pl.when(k == 0)
        def _init():
            g_ref[...] = jnp.zeros_like(g_ref)
            s_ref[...] = jnp.zeros_like(s_ref)

        # Row-mask the (possibly partial, or fully out-of-range overhang) tile.
        # This replaces any wrapper-side padding copy of X.
        row0 = (split * steps_per_split + k) * tile_n
        rows_left = n_true - row0
        row = lax.broadcasted_iota(jnp.int32, (tile_n, 1), 0)
        xf = jnp.where(row < rows_left, x_ref[...].astype(jnp.float32), 0.0)

        # MXU operands (bf16 by default, f32 accumulation); statistics stay f32.
        xw = xf.astype(compute_dtype)
        # Gram update: contract the batch (sublane) dim of both operands.
        # TODO(synk): if MLIR shows a per-step vxpose for this transposed-LHS
        # contraction, restage a (C, tile_n)-oriented copy of the tile instead.
        g_ref[...] += lax.dot_general(
            xw, xw,
            dimension_numbers=(((0,), (0,)), ((), ())),
            preferred_element_type=jnp.float32,
        )
        # Column sums (f32, from the un-rounded values).
        # TODO(synk): micro-opt — accumulate (8, C) per-sublane partials or fold
        # onto the MXU with a ones(1, tile_n) contraction to skip the XLU reduce.
        s_ref[...] += jnp.sum(xf, axis=0, keepdims=True)

    return kernel


def feddecorr_loss(x, *, use_bf16_matmul=True, tile_n=None, num_splits=1,
                   force_pallas=False):
    """FedDecorrLoss forward.  x: (N, C) array.  Returns scalar float32 loss."""
    n, c = x.shape
    if n == 1:
        return jnp.float32(0.0)          # matches the PyTorch early return
    if not force_pallas and n * c < _XLA_FALLBACK_ELEMS:
        return _feddecorr_reference(x)

    itemsize = jnp.dtype(x.dtype).itemsize
    c_lanes = _round_up(c, _LANE)        # physical lane padding (layout only)
    c_sub = _round_up(c, _SUBLANE)
    budget = _vmem_budget_bytes()

    # Resident per-core bytes: Gram + sum output blocks (counted as double-
    # buffered to stay conservative) + the double-buffered input tile.
    fixed = 2 * (c_sub * c_lanes * 4 + _SUBLANE * c_lanes * 4)
    if fixed + 2 * _LANE * c_lanes * itemsize > budget:
        # TODO(synk): (Ci, Cj)-blocked Gram for very large C instead of fallback.
        return _feddecorr_reference(x)

    if tile_n is None:
        tile_n = 4096                    # fewer grid steps; budget shrinks it
        while tile_n > _LANE and fixed + 2 * tile_n * c_lanes * itemsize > budget:
            tile_n //= 2
    tile_n = _round_up(max(_SUBLANE, min(tile_n, _round_up(n, _SUBLANE))), _SUBLANE)

    n_tiles = pl.cdiv(n, tile_n)
    num_splits = max(1, min(int(num_splits), n_tiles))
    steps = pl.cdiv(n_tiles, num_splits)
    last_tile = n_tiles - 1

    def x_index_map(split, k):
        # Clamp so the (few) fully-masked overhang tiles of the last split never
        # index past the array; the kernel row-mask zeroes their contribution.
        return (jnp.minimum(split * steps + k, last_tile), 0)

    compute_dtype = jnp.bfloat16 if use_bf16_matmul else jnp.float32
    kernel = _make_kernel(n, tile_n, steps, compute_dtype)

    g_parts, s_parts = pl.pallas_call(
        kernel,
        out_shape=(jax.ShapeDtypeStruct((num_splits, c, c), jnp.float32),
                   jax.ShapeDtypeStruct((num_splits, 1, c), jnp.float32)),
        grid_spec=pltpu.PrefetchScalarGridSpec(
            num_scalar_prefetch=0,
            grid=(num_splits, steps),
            # TODO(synk): for small C, sweep pipeline_mode=pl.Buffered(3) here.
            in_specs=[pl.BlockSpec((tile_n, c), x_index_map)],
            out_specs=(pl.BlockSpec((None, c, c), lambda s, k: (s, 0, 0)),
                       pl.BlockSpec((None, 1, c), lambda s, k: (s, 0, 0))),
        ),
        compiler_params=pltpu.CompilerParams(
            dimension_semantics=("parallel", "arbitrary"),
            vmem_limit_bytes=budget,
        ),
    )(x)

    # ---- tiny O(C^2) finalize in plain XLA (vector broadcasts only) ----------
    # NOTE: the sufficient-statistics form (diag(G) - s^2/N, G - s s^T/N) can
    # lose precision for features with huge mean/std ratio; pre-center upstream
    # in that regime.
    nf = jnp.float32(n)
    g = jnp.sum(g_parts, axis=0)                     # (C, C)
    s = jnp.sum(s_parts, axis=0)[0]                  # (C,)
    var = jnp.maximum(jnp.diagonal(g) - s * s / nf, 0.0) / (nf - 1.0)
    w = 1.0 / (EPS + var)                            # 1 / (eps + var_j)
    cov = g - (s[:, None] * s[None, :]) / nf         # (X - mean)^T (X - mean)
    corr_sq = (cov * cov) * (w[:, None] * w[None, :])
    off_sum = jnp.sum(corr_sq) - jnp.sum(jnp.diagonal(corr_sq))
    return off_sum / jnp.float32(c * (c - 1)) / nf


if __name__ == "__main__":
    key = jax.random.PRNGKey(0)
    k0, k1 = jax.random.split(key)

    # Non-aligned N and C: exercises the remainder row-mask (no padding copy),
    # a non-multiple-of-128 feature dim, and a multi-step reduction grid.
    N, C = 300, 160
    x = 1.5 * jax.random.normal(k0, (N, C), dtype=jnp.float32) + 0.3
    ref = _feddecorr_reference(x)

    # f32 MXU path, explicit 3-step reduction grid.
    loss_f32 = feddecorr_loss(x, tile_n=128, use_bf16_matmul=False)
    jax.block_until_ready(loss_f32)
    assert jnp.allclose(loss_f32, ref, rtol=1e-2, atol=1e-5), (loss_f32, ref)

    # Default path: bf16 MXU operands, f32 statistics, auto tile sizing.
    loss_bf16 = feddecorr_loss(x)
    jax.block_until_ready(loss_bf16)
    assert jnp.allclose(loss_bf16, ref, rtol=5e-2, atol=1e-3), (loss_bf16, ref)

    # Two-way split of N (leading "parallel" grid axis, partial statistics
    # combined in the epilogue) -- the v7x two-TensorCore path; also exercises
    # the clamped index_map for the fully-masked overhang tile.
    loss_split = feddecorr_loss(x, tile_n=128, num_splits=2, use_bf16_matmul=False)
    jax.block_until_ready(loss_split)
    assert jnp.allclose(loss_split, ref, rtol=1e-2, atol=1e-5), (loss_split, ref)

    # Small shape forced through the Pallas path (C < 128, single partial tile).
    xs = jax.random.normal(k1, (8, 32), dtype=jnp.float32)
    ref_small = _feddecorr_reference(xs)
    loss_small = feddecorr_loss(xs, force_pallas=True, use_bf16_matmul=False)
    jax.block_until_ready(loss_small)
    assert jnp.allclose(loss_small, ref_small, rtol=1e-2, atol=1e-5), (loss_small, ref_small)

    # bf16-streamed input (halves input DMA bytes when the cast fuses upstream).
    loss_h = feddecorr_loss(x.astype(jnp.bfloat16), tile_n=128)
    jax.block_until_ready(loss_h)
    assert jnp.allclose(loss_h, ref, rtol=1e-1, atol=1e-3), (loss_h, ref)

    # N == 1 early return matches the PyTorch module.
    assert float(feddecorr_loss(jnp.ones((1, 32), jnp.float32))) == 0.0

    print("KERNEL_OK")
</pallas_src>

<mosaic_0001>
module attributes {stable_mosaic.version = 11 : i64} {
  func.func @kernel(%arg0: i32, %arg1: i32, %arg2: memref<128x160xf32, #tpu.memory_space<vmem>>, %arg3: memref<1x160x160xf32, #tpu.memory_space<vmem>>, %arg4: memref<1x1x160xf32, #tpu.memory_space<vmem>>) attributes {dimension_semantics = [#tpu.dimension_semantics<parallel>, #tpu.dimension_semantics<arbitrary>], iteration_bounds = array<i64: 1, 3>, scalar_prefetch = 0 : i64, scratch_operands = 0 : i64, tpu.core_type = #tpu.core_type<tc>, window_params = [{transform_indices = @transform_0, window_bounds = array<i64: 128, 160>}, {transform_indices = @transform_1, window_bounds = array<i64: 1, 160, 160>}, {transform_indices = @transform_2, window_bounds = array<i64: 1, 1, 160>}]} {
    %c0_i32 = arith.constant 0 : i32
    %0 = arith.cmpi eq, %arg1, %c0_i32 : i32
    %1 = arith.extui %0 : i1 to i32
    %c0_i32_0 = arith.constant 0 : i32
    %2 = arith.cmpi ne, %1, %c0_i32_0 : i32
    scf.if %2 {
      %cst_16 = arith.constant 0.000000e+00 : f32
      %30 = vector.broadcast %cst_16 : f32 to vector<160x160xf32>
      %c0_17 = arith.constant 0 : index
      %c0_18 = arith.constant 0 : index
      %c0_19 = arith.constant 0 : index
      %31 = vector.load %arg3[%c0_17, %c0_18, %c0_19] : memref<1x160x160xf32, #tpu.memory_space<vmem>>, vector<1x160x160xf32>
      %32 = vector.shape_cast %31 : vector<1x160x160xf32> to vector<160x160xf32>
      %33 = vector.shape_cast %30 : vector<160x160xf32> to vector<1x160x160xf32>
      tpu.vector_store %arg3[%c0_17, %c0_18, %c0_19], %33 {strides = array<i32>} : memref<1x160x160xf32, #tpu.memory_space<vmem>>, vector<1x160x160xf32>,
      %cst_20 = arith.constant 0.000000e+00 : f32
      %34 = vector.broadcast %cst_20 : f32 to vector<1x160xf32>
      %c0_21 = arith.constant 0 : index
      %c0_22 = arith.constant 0 : index
      %c0_23 = arith.constant 0 : index
      %35 = vector.load %arg4[%c0_21, %c0_22, %c0_23] : memref<1x1x160xf32, #tpu.memory_space<vmem>>, vector<1x1x160xf32>
      %36 = vector.shape_cast %35 : vector<1x1x160xf32> to vector<1x160xf32>
      %37 = vector.shape_cast %34 : vector<1x160xf32> to vector<1x1x160xf32>
      tpu.vector_store %arg4[%c0_21, %c0_22, %c0_23], %37 {strides = array<i32>} : memref<1x1x160xf32, #tpu.memory_space<vmem>>, vector<1x1x160xf32>,
    } else {
    }
    %c3_i32 = arith.constant 3 : i32
    %3 = arith.muli %arg0, %c3_i32 : i32
    %4 = arith.addi %3, %arg1 : i32
    %c128_i32 = arith.constant 128 : i32
    %5 = arith.muli %4, %c128_i32 : i32
    %c300_i32 = arith.constant 300 : i32
    %6 = arith.subi %c300_i32, %5 : i32
    %7 = tpu.iota {dimensions = array<i32: 0>} : vector<128x1xi32>
    %8 = vector.broadcast %6 : i32 to vector<128x1xi32>
    %9 = arith.cmpi slt, %7, %8 : vector<128x1xi32>
    %c0 = arith.constant 0 : index
    %c0_1 = arith.constant 0 : index
    %10 = vector.load %arg2[%c0, %c0_1] : memref<128x160xf32, #tpu.memory_space<vmem>>, vector<128x160xf32>
    %cst = arith.constant 0.000000e+00 : f32
    %11 = vector.shape_cast %9 : vector<128x1xi1> to vector<128x1xi1>
    %12 = vector.broadcast %11 : vector<128x1xi1> to vector<128x160xi1>
    %13 = vector.broadcast %cst : f32 to vector<128x160xf32>
    %14 = arith.select %12, %10, %13 : vector<128x160xi1>, vector<128x160xf32>
    %c0_2 = arith.constant 0 : index
    %c0_3 = arith.constant 0 : index
    %c0_4 = arith.constant 0 : index
    %15 = vector.load %arg3[%c0_2, %c0_3, %c0_4] : memref<1x160x160xf32, #tpu.memory_space<vmem>>, vector<1x160x160xf32>
    %16 = vector.shape_cast %15 : vector<1x160x160xf32> to vector<160x160xf32>
    %cst_5 = arith.constant dense<0.000000e+00> : vector<160x160xf32>
    %17 = tpu.matmul %14, %14, %cst_5 {dimension_numbers = #tpu.dot_dimension_numbers<[0], [0], [1], [1], [0, 1, 1, 1], [], []>} : vector<128x160xf32>, vector<128x160xf32>, vector<160x160xf32> -> vector<160x160xf32>
    %18 = arith.addf %16, %17 : vector<160x160xf32>
    %c0_6 = arith.constant 0 : index
    %c0_7 = arith.constant 0 : index
    %c0_8 = arith.constant 0 : index
    %19 = vector.load %arg3[%c0_6, %c0_7, %c0_8] : memref<1x160x160xf32, #tpu.memory_space<vmem>>, vector<1x160x160xf32>
    %20 = vector.shape_cast %19 : vector<1x160x160xf32> to vector<160x160xf32>
    %21 = vector.shape_cast %18 : vector<160x160xf32> to vector<1x160x160xf32>
    tpu.vector_store %arg3[%c0_6, %c0_7, %c0_8], %21 {strides = array<i32>} : memref<1x160x160xf32, #tpu.memory_space<vmem>>, vector<1x160x160xf32>,
    %c0_9 = arith.constant 0 : index
    %c0_10 = arith.constant 0 : index
    %c0_11 = arith.constant 0 : index
    %22 = vector.load %arg4[%c0_9, %c0_10, %c0_11] : memref<1x1x160xf32, #tpu.memory_space<vmem>>, vector<1x1x160xf32>
    %23 = vector.shape_cast %22 : vector<1x1x160xf32> to vector<1x160xf32>
    %cst_12 = arith.constant dense<0.000000e+00> : vector<160xf32>
    %24 = vector.multi_reduction <add>, %14, %cst_12 [0] : vector<128x160xf32> to vector<160xf32>
    %25 = vector.shape_cast %24 : vector<160xf32> to vector<1x160xf32>
    %26 = arith.addf %23, %25 : vector<1x160xf32>
    %c0_13 = arith.constant 0 : index
    %c0_14 = arith.constant 0 : index
    %c0_15 = arith.constant 0 : index
    %27 = vector.load %arg4[%c0_13, %c0_14, %c0_15] : memref<1x1x160xf32, #tpu.memory_space<vmem>>, vector<1x1x160xf32>
    %28 = vector.shape_cast %27 : vector<1x1x160xf32> to vector<1x160xf32>
    %29 = vector.shape_cast %26 : vector<1x160xf32> to vector<1x1x160xf32>
    tpu.vector_store %arg4[%c0_13, %c0_14, %c0_15], %29 {strides = array<i32>} : memref<1x1x160xf32, #tpu.memory_space<vmem>>, vector<1x1x160xf32>,
    return
  }
  func.func @transform_0(%arg0: i32, %arg1: i32) -> (i32, i32) {
    %c3_i32 = arith.constant 3 : i32
    %0 = arith.muli %arg0, %c3_i32 : i32
    %1 = arith.addi %0, %arg1 : i32
    %c2_i32 = arith.constant 2 : i32
    %2 = arith.minsi %1, %c2_i32 : i32
    %c0_i32 = arith.constant 0 : i32
    %c0_i32_0 = arith.constant 0 : i32
    return %2, %c0_i32 : i32, i32
  }
  func.func @transform_1(%arg0: i32, %arg1: i32) -> (i32, i32, i32) {
    %c0_i32 = arith.constant 0 : i32
    %c0_i32_0 = arith.constant 0 : i32
    %c0_i32_1 = arith.constant 0 : i32
    return %arg0, %c0_i32, %c0_i32_0 : i32, i32, i32
  }
  func.func @transform_2(%arg0: i32, %arg1: i32) -> (i32, i32, i32) {
    %c0_i32 = arith.constant 0 : i32
    %c0_i32_0 = arith.constant 0 : i32
    %c0_i32_1 = arith.constant 0 : i32
    return %arg0, %c0_i32, %c0_i32_0 : i32, i32, i32
  }
}

</mosaic_0001>

<llo_original>
// kernel: tpu_custom_call.1
$region0: #{tpu_custom_call.1}
  #allocation0 [shape = 'u32[]', space=smem, size = 0x4, offset = 0x4, fixed_abs, tag = 'smem constant byte address 0x4 - core index']
  #allocation1 [shape = 'u32[144,128]{1,0:T(1,128)}', space=vmem, size = 0x12000, scoped, tag = 'internal scratch']
  %s0 = inlined_call_operand.vmem [shape: f32[300,160], index: 0, kind: input, shape index: {}]
  %s1 = inlined_call_operand.hbm [shape: f32[1,160,160], index: 1, kind: output, shape index: {0}]
  %s2 = inlined_call_operand.hbm [shape: f32[1,1,160], index: 2, kind: output, shape index: {1}]
  %3 = xla_tuple %s1, %s2
  %s4 = sld [smem:[#allocation0]]
  $region49: #{tpu_custom_call.1} parent=0
    _
  %s6 = ssub.s32 1, %s4
  %s7 = scalar_select 0, %s6, %s4
  $region1: #{tpu_custom_call.1} parent=0
    #allocation2 [shape = 'u8[163840]{0}', space=vmem, size = 0x28000, scoped, tag = 'output window, operand 0, single buffered']
    #allocation3 [shape = 's32[2]{0}', space=sflag, size = 0x8, scoped, tag = 'scoped memory for tpu_custom_call.1']
    #allocation4 [shape = 'u8[1024]{0}', space=vmem, size = 0x400, scoped, tag = 'output window, operand 1, single buffered']
    #allocation5 [shape = 's32[1]{0}', space=sflag, size = 0x4, scoped, tag = 'scoped memory for tpu_custom_call.1']
    %8 = vsyncpa [#allocation3], 0
    %9 = vsyncpa [#allocation5], 0
    loop: start=0, step=1, limit=5
    $region2: #{tpu_custom_call.1} parent=1 // loop_pre_header
      _
    $region3: #{tpu_custom_call.1} parent=1 // loop_header
      %s11 = sphi 0, %s15
      %p12 = scmp.ge.s32.totalorder %s11, 5
      %s18 = sphi 0, %s30
      %s19 = sphi 0, %s26
      %s20 = sphi 0, %s18
      %s21 = sphi 0, %s19
      %s22 = sphi 0, %s20
      %s23 = sphi 0, %s21
      %s41 = sphi 0, %s43
      %s44 = sphi 0, %s41
      %s45 = sphi 0, %s44
      %s61 = sphi 0, %s45
      %s67 = sphi 0, %s69
      %s70 = sphi 0, %s67
      %s71 = sphi 0, %s70
      %s87 = sphi 0, %s71
      %s93 = sphi 0, %s95
      %s96 = sphi 0, %s93
      %s97 = sphi 0, %s96
      %s113 = sphi 0, %s97
    $region4: #{tpu_custom_call.1} parent=1 // loop_header_branch
      %14 = sbr.rel (%p12) target = $region8
    $region5: #{tpu_custom_call.1} parent=1 // loop_body
      %s16 = ssub.s32 %s11, 1
      %s17 = ssub.s32 %s11, 2
      %s24 = sadd.s32 1, %s19
      %p25 = scmp.ge.s32.totalorder %s24, 3
      %s26 = scalar_select %p25, 0, %s24
      %s27 = sadd.s32 1, %s18
      %s28 = scalar_select %p25, %s27, %s18
      %p29 = scmp.ge.s32.totalorder %s28, 1
      %s30 = scalar_select %p29, 0, %s28
      %s31 = smul.u32 %s18, 3
      %s32 = sadd.s32 %s31, %s19
      %p33 = scmp.lt.s32.totalorder %s32, 2
      %s34 = scalar_select %p33, %s32, 2
      %s35 = smul.u32 %s30, 3
      %s36 = sadd.s32 %s35, %s26
      %p37 = scmp.lt.s32.totalorder %s36, 2
      %s38 = scalar_select %p37, %s36, 2
      %s39 = ssub.s32 %s34, %s38
      %p40 = scmp.eq.s32.totalorder %s39, 0
      %s42 = sadd.s32 %s41, 1
      %s43 = scalar_select %p40, %s41, %s42
      %p46 = pneg %p40
      %p47 = scmp.eq.s32.totalorder %s11, 2
      %p48 = por %p46, %p47
      %p49 = scmp.ne.s32.totalorder %s41, %s44
      %p50 = scmp.eq.s32.totalorder %s11, 0
      %p51 = por %p49, %p50
      %p52 = scmp.ne.s32.totalorder %s41, %s44
      %p53 = scmp.eq.s32.totalorder %s16, 2
      %p54 = por %p52, %p53
      %p55 = scmp.ne.s32.totalorder %s44, %s45
      %p56 = scmp.eq.s32.totalorder %s16, 0
      %p57 = por %p55, %p56
      %p58 = scmp.ne.s32.totalorder %s44, %s45
      %p59 = scmp.eq.s32.totalorder %s17, 2
      %p60 = por %p58, %p59
      %p62 = scmp.ne.s32.totalorder %s45, %s61
      %p63 = scmp.eq.s32.totalorder %s17, 0
      %p64 = por %p62, %p63
      %s65 = ssub.s32 %s18, %s30
      %p66 = scmp.eq.s32.totalorder %s65, 0
      %s68 = sadd.s32 %s67, 1
      %s69 = scalar_select %p66, %s67, %s68
      %p72 = pneg %p66
      %p73 = scmp.eq.s32.totalorder %s11, 2
      %p74 = por %p72, %p73
      %p75 = scmp.ne.s32.totalorder %s67, %s70
      %p76 = scmp.eq.s32.totalorder %s11, 0
      %p77 = por %p75, %p76
      %p78 = scmp.ne.s32.totalorder %s67, %s70
      %p79 = scmp.eq.s32.totalorder %s16, 2
      %p80 = por %p78, %p79
      %p81 = scmp.ne.s32.totalorder %s70, %s71
      %p82 = scmp.eq.s32.totalorder %s16, 0
      %p83 = por %p81, %p82
      %p84 = scmp.ne.s32.totalorder %s70, %s71
      %p85 = scmp.eq.s32.totalorder %s17, 2
      %p86 = por %p84, %p85
      %p88 = scmp.ne.s32.totalorder %s71, %s87
      %p89 = scmp.eq.s32.totalorder %s17, 0
      %p90 = por %p88, %p89
      %s91 = ssub.s32 %s18, %s30
      %p92 = scmp.eq.s32.totalorder %s91, 0
      %s94 = sadd.s32 %s93, 1
      %s95 = scalar_select %p92, %s93, %s94
      %p98 = pneg %p92
      %p99 = scmp.eq.s32.totalorder %s11, 2
      %p100 = por %p98, %p99
      %p101 = scmp.ne.s32.totalorder %s93, %s96
      %p102 = scmp.eq.s32.totalorder %s11, 0
      %p103 = por %p101, %p102
      %p104 = scmp.ne.s32.totalorder %s93, %s96
      %p105 = scmp.eq.s32.totalorder %s16, 2
      %p106 = por %p104, %p105
      %p107 = scmp.ne.s32.totalorder %s96, %s97
      %p108 = scmp.eq.s32.totalorder %s16, 0
      %p109 = por %p107, %p108
      %p110 = scmp.ne.s32.totalorder %s96, %s97
      %p111 = scmp.eq.s32.totalorder %s17, 2
      %p112 = por %p110, %p111
      %p114 = scmp.ne.s32.totalorder %s97, %s113
      %p115 = scmp.eq.s32.totalorder %s17, 0
      %p116 = por %p114, %p115
      %p117 = scmp.le.s32.totalorder 1, %s11
      %p118 = scmp.lt.s32.totalorder %s11, 4
      %p119 = pnand %p117, %p118
      %p120 = pneg %p119
      // Predicated region
      $region9: #{tpu_custom_call.1} parent=5 // pred_check
        _
      $region10: #{tpu_custom_call.1} parent=5 // pred_check_branch
        %122 = sbr.rel (%p119) target = $region12
      $region11: #{tpu_custom_call.1} parent=5 // pred_region
        %s123 = ssub.s32 %s11, 1
      $region12: #{tpu_custom_call.1} parent=5 // pred_fallthru
        _
      %p124 = scmp.lt.s32.totalorder %s11, 3
      // Predicated region
      $region13: #{tpu_custom_call.1} parent=5 // pred_check
        %p125 = pneg %p124
      $region14: #{tpu_custom_call.1} parent=5 // pred_check_branch
        %127 = sbr.rel (%p125) target = $region16
      $region15: #{tpu_custom_call.1} parent=5 // pred_region
        // Predicated region
        $region17: #{tpu_custom_call.1} parent=15 // pred_check
          %p128 = pneg %p51
        $region18: #{tpu_custom_call.1} parent=15 // pred_check_branch
          %130 = sbr.rel (%p128) target = $region20
        $region19: #{tpu_custom_call.1} parent=15 // pred_region
          %s131 = smul.u32 %s18, 3
          %s132 = sadd.s32 %s131, %s19
          %p133 = scmp.lt.s32.totalorder %s132, 2
          %s134 = scalar_select %p133, %s132, 2
          %s135 = smul.u32 16, %s134
          %s136 = ssub.s32 38, %s135
          %p137 = scmp.lt.s32.totalorder %s136, 16
          %s138 = scalar_select %p137, %s136, 16
          %s139 = smul.u32 128, %s138
          %s140 = smul.u32 %s139, 2
          %p141 = scmp.lt.s32.totalorder %s135, 37
          %s142 = scalar_select %p141, %s135, 37
          %s143 = smul.addr %s142, 2
          %s144 = smul.addr %s143, 8
          %s145 = scalar_lea.vmem %s0, %s144
          %s146 = smul.u32 %s18, 3
          %s147 = sadd.s32 %s146, %s19
          %p148 = scmp.lt.s32.totalorder %s147, 2
          %s149 = scalar_select %p148, %s147, 2
          %s150 = smul.u32 16, %s149
          %s151 = ssub.s32 38, %s150
          %p152 = scmp.lt.s32.totalorder %s151, 16
          %s153 = scalar_select %p152, %s151, 16
          %s154 = smul.u32 128, %s153
          %s155 = smul.u32 %s154, 2
        $region20: #{tpu_custom_call.1} parent=15 // pred_fallthru
          _
      $region16: #{tpu_custom_call.1} parent=5 // pred_fallthru
        _
      %p156 = scmp.le.s32.totalorder 1, %s11
      %p157 = scmp.lt.s32.totalorder %s11, 4
      %p158 = pnand %p156, %p157
      %p159 = pneg %p158
      // Predicated region
      $region21: #{tpu_custom_call.1} parent=5 // pred_check
        _
      $region22: #{tpu_custom_call.1} parent=5 // pred_check_branch
        %161 = sbr.rel (%p158) target = $region24
      $region23: #{tpu_custom_call.1} parent=5 // pred_region
        %s162 = ssub.s32 %s11, 1
        %s163 = smul.u32 %s20, 3
        %s164 = sadd.s32 %s163, %s21
        %p165 = scmp.lt.s32.totalorder %s164, 2
        %s166 = scalar_select %p165, %s164, 2
        %s167 = smul.u32 16, %s166
        %s168 = ssub.s32 38, %s167
        %p169 = scmp.lt.s32.totalorder %s168, 16
        %s170 = scalar_select %p169, %s168, 16
        %s171 = smul.u32 128, %s170
        %s172 = smul.u32 %s171, 2
        %p173 = scmp.lt.s32.totalorder %s167, 37
        %s174 = scalar_select %p173, %s167, 37
        %s175 = smul.addr %s174, 2
        %s176 = smul.addr %s175, 8
        %s177 = scalar_lea.vmem %s0, %s176
        %p178 = pneg %p57
        %p179 = pneg %p54
        %p180 = pneg %p83
        %p181 = pneg %p80
        %p182 = pneg %p109
        %p183 = pneg %p106
        %s184 = smul.u32 %s20, 3
        %s185 = sadd.s32 %s184, %s21
        %p186 = scmp.lt.s32.totalorder %s185, 2
        %s187 = scalar_select %p186, %s185, 2
        %s188 = smul.u32 16, %s187
        %s189 = ssub.s32 38, %s188
        %p190 = scmp.lt.s32.totalorder %s189, 16
        %s191 = scalar_select %p190, %s189, 16
        %s192 = smul.u32 128, %s191
        %s193 = smul.u32 %s192, 2
        %p194 = scmp.lt.s32.totalorder %s188, 37
        %s195 = scalar_select %p194, %s188, 37
        %s196 = smul.addr %s195, 2
        %s197 = smul.addr %s196, 8
        %s198 = scalar_lea.vmem %s0, %s197
        %s199 = smul.u32 %s20, 3
        %s200 = sadd.s32 %s199, %s21
        %p201 = scmp.lt.s32.totalorder %s200, 2
        %s202 = scalar_select %p201, %s200, 2
        %s203 = smul.u32 16, %s202
        %s204 = ssub.s32 38, %s203
        %p205 = scmp.lt.s32.totalorder %s204, 16
        %s206 = scalar_select %p205, %s204, 16
        %s207 = smul.u32 128, %s206
        %s208 = smul.u32 %s207, 2
        %p209 = scmp.eq.s32.totalorder %s21, 0
        // Predicated region
        $region25: #{tpu_custom_call.1} parent=23 // pred_check
          %p210 = pneg %p209
        $region26: #{tpu_custom_call.1} parent=23 // pred_check_branch
          %212 = sbr.rel (%p210) target = $region28
        $region27: #{tpu_custom_call.1} parent=23 // pred_region
          %213 = vst [vmem:[#allocation2] sm:$0xff] 0.0
          %vm214 = vcmask 261120
          %215 = vst.msk [vmem:[#allocation2 + $0x8] sm:$0xff] %vm214, 0.0
          %216 = vst [vmem:[#allocation2 + $0x10] sm:$0xff] 0.0
          %217 = vst.msk [vmem:[#allocation2 + $0x18] sm:$0xff] %vm214, 0.0
          %218 = vst [vmem:[#allocation2 + $0x20] sm:$0xff] 0.0
          %219 = vst.msk [vmem:[#allocation2 + $0x28] sm:$0xff] %vm214, 0.0
          %220 = vst [vmem:[#allocation2 + $0x30] sm:$0xff] 0.0
          %221 = vst.msk [vmem:[#allocation2 + $0x38] sm:$0xff] %vm214, 0.0
          %222 = vst [vmem:[#allocation2 + $0x40] sm:$0xff] 0.0
          %223 = vst.msk [vmem:[#allocation2 + $0x48] sm:$0xff] %vm214, 0.0
          %224 = vst [vmem:[#allocation2 + $0x50] sm:$0xff] 0.0
          %225 = vst.msk [vmem:[#allocation2 + $0x58] sm:$0xff] %vm214, 0.0
          %226 = vst [vmem:[#allocation2 + $0x60] sm:$0xff] 0.0
          %227 = vst.msk [vmem:[#allocation2 + $0x68] sm:$0xff] %vm214, 0.0
          %228 = vst [vmem:[#allocation2 + $0x70] sm:$0xff] 0.0
          %229 = vst.msk [vmem:[#allocation2 + $0x78] sm:$0xff] %vm214, 0.0
          %230 = vst [vmem:[#allocation2 + $0x80] sm:$0xff] 0.0
          %231 = vst.msk [vmem:[#allocation2 + $0x88] sm:$0xff] %vm214, 0.0
          %232 = vst [vmem:[#allocation2 + $0x90] sm:$0xff] 0.0
          %233 = vst.msk [vmem:[#allocation2 + $0x98] sm:$0xff] %vm214, 0.0
          %234 = vst [vmem:[#allocation2 + $0xa0] sm:$0xff] 0.0
          %235 = vst.msk [vmem:[#allocation2 + $0xa8] sm:$0xff] %vm214, 0.0
          %236 = vst [vmem:[#allocation2 + $0xb0] sm:$0xff] 0.0
          %237 = vst.msk [vmem:[#allocation2 + $0xb8] sm:$0xff] %vm214, 0.0
          %238 = vst [vmem:[#allocation2 + $0xc0] sm:$0xff] 0.0
          %239 = vst.msk [vmem:[#allocation2 + $0xc8] sm:$0xff] %vm214, 0.0
          %240 = vst [vmem:[#allocation2 + $0xd0] sm:$0xff] 0.0
          %241 = vst.msk [vmem:[#allocation2 + $0xd8] sm:$0xff] %vm214, 0.0
          %242 = vst [vmem:[#allocation2 + $0xe0] sm:$0xff] 0.0
          %243 = vst.msk [vmem:[#allocation2 + $0xe8] sm:$0xff] %vm214, 0.0
          %244 = vst [vmem:[#allocation2 + $0xf0] sm:$0xff] 0.0
          %245 = vst.msk [vmem:[#allocation2 + $0xf8] sm:$0xff] %vm214, 0.0
          %246 = vst [vmem:[#allocation2 + $0x100] sm:$0xff] 0.0
          %247 = vst.msk [vmem:[#allocation2 + $0x108] sm:$0xff] %vm214, 0.0
          %248 = vst [vmem:[#allocation2 + $0x110] sm:$0xff] 0.0
          %249 = vst.msk [vmem:[#allocation2 + $0x118] sm:$0xff] %vm214, 0.0
          %250 = vst [vmem:[#allocation2 + $0x120] sm:$0xff] 0.0
          %251 = vst.msk [vmem:[#allocation2 + $0x128] sm:$0xff] %vm214, 0.0
          %252 = vst [vmem:[#allocation2 + $0x130] sm:$0xff] 0.0
          %253 = vst.msk [vmem:[#allocation2 + $0x138] sm:$0xff] %vm214, 0.0
          %v254 = vlaneseq
          %vm255 = vcmp.ge.s32.totalorder %v254, 0
          %vm256 = vcmp.lt.s32.totalorder %v254, 160
          %vm257 = vmand %vm255, %vm256
          %258 = vst.msk [vmem:[#allocation4] sm:$0x3] %vm257, 0.0
        $region28: #{tpu_custom_call.1} parent=23 // pred_fallthru
          _
        %s259 = smul.u32 %s20, 3
        %s260 = sadd.s32 %s259, %s21
        %s261 = smul.u32 %s260, 128
        %s262 = ssub.s32 300, %s261
        %v263 = vlaneseq
        %v264 = vshrl.u32 %v263, 7
        %v265 = vadd.s32 %v264, 8
        %v266 = vadd.s32 %v264, 16
        %v267 = vadd.s32 %v264, 24
        %v268 = vadd.s32 %v264, 32
        %v269 = vadd.s32 %v264, 40
        %v270 = vadd.s32 %v264, 48
        %v271 = vadd.s32 %v264, 56
        %v272 = vadd.s32 %v264, 64
        %v273 = vadd.s32 %v264, 72
        %v274 = vadd.s32 %v264, 80
        %v275 = vadd.s32 %v264, 88
        %v276 = vadd.s32 %v264, 96
        %v277 = vadd.s32 %v264, 104
        %v278 = vadd.s32 %v264, 112
        %v279 = vadd.s32 %v264, 120
        %v280 = vstv %s262
        %vm281 = vcmp.lt.s32.totalorder %v264, %v280
        %vm282 = vcmp.lt.s32.totalorder %v265, %v280
        %vm283 = vcmp.lt.s32.totalorder %v266, %v280
        %vm284 = vcmp.lt.s32.totalorder %v267, %v280
        %vm285 = vcmp.lt.s32.totalorder %v268, %v280
        %vm286 = vcmp.lt.s32.totalorder %v269, %v280
        %vm287 = vcmp.lt.s32.totalorder %v270, %v280
        %vm288 = vcmp.lt.s32.totalorder %v271, %v280
        %vm289 = vcmp.lt.s32.totalorder %v272, %v280
        %vm290 = vcmp.lt.s32.totalorder %v273, %v280
        %vm291 = vcmp.lt.s32.totalorder %v274, %v280
        %vm292 = vcmp.lt.s32.totalorder %v275, %v280
        %vm293 = vcmp.lt.s32.totalorder %v276, %v280
        %vm294 = vcmp.lt.s32.totalorder %v277, %v280
        %vm295 = vcmp.lt.s32.totalorder %v278, %v280
        %vm296 = vcmp.lt.s32.totalorder %v279, %v280
        %v297 = vld [vmem:[%s198] sm:$0xff]
        %v298 = vld [vmem:[%s198 + $0x8] sm:$0xff]
        %v299 = vld [vmem:[%s198 + $0x10] sm:$0xff]
        %v300 = vld [vmem:[%s198 + $0x18] sm:$0xff]
        %v301 = vld [vmem:[%s198 + $0x20] sm:$0xff]
        %v302 = vld [vmem:[%s198 + $0x28] sm:$0xff]
        %v303 = vld [vmem:[%s198 + $0x30] sm:$0xff]
        %v304 = vld [vmem:[%s198 + $0x38] sm:$0xff]
        %v305 = vld [vmem:[%s198 + $0x40] sm:$0xff]
        %v306 = vld [vmem:[%s198 + $0x48] sm:$0xff]
        %v307 = vld [vmem:[%s198 + $0x50] sm:$0xff]
        %v308 = vld [vmem:[%s198 + $0x58] sm:$0xff]
        %v309 = vld [vmem:[%s198 + $0x60] sm:$0xff]
        %v310 = vld [vmem:[%s198 + $0x68] sm:$0xff]
        %v311 = vld [vmem:[%s198 + $0x70] sm:$0xff]
        %v312 = vld [vmem:[%s198 + $0x78] sm:$0xff]
        %v313 = vld [vmem:[%s198 + $0x80] sm:$0xff]
        %v314 = vld [vmem:[%s198 + $0x88] sm:$0xff]
        %v315 = vld [vmem:[%s198 + $0x90] sm:$0xff]
        %v316 = vld [vmem:[%s198 + $0x98] sm:$0xff]
        %v317 = vld [vmem:[%s198 + $0xa0] sm:$0xff]
        %v318 = vld [vmem:[%s198 + $0xa8] sm:$0xff]
        %v319 = vld [vmem:[%s198 + $0xb0] sm:$0xff]
        %v320 = vld [vmem:[%s198 + $0xb8] sm:$0xff]
        %v321 = vld [vmem:[%s198 + $0xc0] sm:$0xff]
        %v322 = vld [vmem:[%s198 + $0xc8] sm:$0xff]
        %v323 = vld [vmem:[%s198 + $0xd0] sm:$0xff]
        %v324 = vld [vmem:[%s198 + $0xd8] sm:$0xff]
        %v325 = vld [vmem:[%s198 + $0xe0] sm:$0xff]
        %v326 = vld [vmem:[%s198 + $0xe8] sm:$0xff]
        %v327 = vld [vmem:[%s198 + $0xf0] sm:$0xff]
        %v328 = vld [vmem:[%s198 + $0xf8] sm:$0xff]
        %v329 = vsel %vm281, 1, 0
        %v330 = vsel %vm282, 1, 0
        %v331 = vsel %vm283, 1, 0
        %v332 = vsel %vm284, 1, 0
        %v333 = vsel %vm285, 1, 0
        %v334 = vsel %vm286, 1, 0
        %v335 = vsel %vm287, 1, 0
        %v336 = vsel %vm288, 1, 0
        %v337 = vsel %vm289, 1, 0
        %v338 = vsel %vm290, 1, 0
        %v339 = vsel %vm291, 1, 0
        %v340 = vsel %vm292, 1, 0
        %v341 = vsel %vm293, 1, 0
        %v342 = vsel %vm294, 1, 0
        %v343 = vsel %vm295, 1, 0
        %v344 = vsel %vm296, 1, 0
        %vm345 = vcmp.eq.s32.totalorder %v329, 1
        %vm346 = vcmp.eq.s32.totalorder %v330, 1
        %vm347 = vcmp.eq.s32.totalorder %v331, 1
        %vm348 = vcmp.eq.s32.totalorder %v332, 1
        %vm349 = vcmp.eq.s32.totalorder %v333, 1
        %vm350 = vcmp.eq.s32.totalorder %v334, 1
        %vm351 = vcmp.eq.s32.totalorder %v335, 1
        %vm352 = vcmp.eq.s32.totalorder %v336, 1
        %vm353 = vcmp.eq.s32.totalorder %v337, 1
        %vm354 = vcmp.eq.s32.totalorder %v338, 1
        %vm355 = vcmp.eq.s32.totalorder %v339, 1
        %vm356 = vcmp.eq.s32.totalorder %v340, 1
        %vm357 = vcmp.eq.s32.totalorder %v341, 1
        %vm358 = vcmp.eq.s32.totalorder %v342, 1
        %vm359 = vcmp.eq.s32.totalorder %v343, 1
        %vm360 = vcmp.eq.s32.totalorder %v344, 1
        %v361 = vsel %vm345, %v297, 0.0
        %v362 = vsel %vm345, %v298, 0.0
        %v363 = vsel %vm346, %v299, 0.0
        %v364 = vsel %vm346, %v300, 0.0
        %v365 = vsel %vm347, %v301, 0.0
        %v366 = vsel %vm347, %v302, 0.0
        %v367 = vsel %vm348, %v303, 0.0
        %v368 = vsel %vm348, %v304, 0.0
        %v369 = vsel %vm349, %v305, 0.0
        %v370 = vsel %vm349, %v306, 0.0
        %v371 = vsel %vm350, %v307, 0.0
        %v372 = vsel %vm350, %v308, 0.0
        %v373 = vsel %vm351, %v309, 0.0
        %v374 = vsel %vm351, %v310, 0.0
        %v375 = vsel %vm352, %v311, 0.0
        %v376 = vsel %vm352, %v312, 0.0
        %v377 = vsel %vm353, %v313, 0.0
        %v378 = vsel %vm353, %v314, 0.0
        %v379 = vsel %vm354, %v315, 0.0
        %v380 = vsel %vm354, %v316, 0.0
        %v381 = vsel %vm355, %v317, 0.0
        %v382 = vsel %vm355, %v318, 0.0
        %v383 = vsel %vm356, %v319, 0.0
        %v384 = vsel %vm356, %v320, 0.0
        %v385 = vsel %vm357, %v321, 0.0
        %v386 = vsel %vm357, %v322, 0.0
        %v387 = vsel %vm358, %v323, 0.0
        %v388 = vsel %vm358, %v324, 0.0
        %v389 = vsel %vm359, %v325, 0.0
        %v390 = vsel %vm359, %v326, 0.0
        %v391 = vsel %vm360, %v327, 0.0
        %v392 = vsel %vm360, %v328, 0.0
        %v393 = vld [vmem:[#allocation2] sm:$0xff]
        %v394 = vld [vmem:[#allocation2 + $0x8] sm:$0xff]
        %v395 = vld [vmem:[#allocation2 + $0x10] sm:$0xff]
        %v396 = vld [vmem:[#allocation2 + $0x18] sm:$0xff]
        %v397 = vld [vmem:[#allocation2 + $0x20] sm:$0xff]
        %v398 = vld [vmem:[#allocation2 + $0x28] sm:$0xff]
        %v399 = vld [vmem:[#allocation2 + $0x30] sm:$0xff]
        %v400 = vld [vmem:[#allocation2 + $0x38] sm:$0xff]
        %v401 = vld [vmem:[#allocation2 + $0x40] sm:$0xff]
        %v402 = vld [vmem:[#allocation2 + $0x48] sm:$0xff]
        %v403 = vld [vmem:[#allocation2 + $0x50] sm:$0xff]
        %v404 = vld [vmem:[#allocation2 + $0x58] sm:$0xff]
        %v405 = vld [vmem:[#allocation2 + $0x60] sm:$0xff]
        %v406 = vld [vmem:[#allocation2 + $0x68] sm:$0xff]
        %v407 = vld [vmem:[#allocation2 + $0x70] sm:$0xff]
        %v408 = vld [vmem:[#allocation2 + $0x78] sm:$0xff]
        %v409 = vld [vmem:[#allocation2 + $0x80] sm:$0xff]
        %v410 = vld [vmem:[#allocation2 + $0x88] sm:$0xff]
        %v411 = vld [vmem:[#allocation2 + $0x90] sm:$0xff]
        %v412 = vld [vmem:[#allocation2 + $0x98] sm:$0xff]
        %v413 = vld [vmem:[#allocation2 + $0xa0] sm:$0xff]
        %v414 = vld [vmem:[#allocation2 + $0xa8] sm:$0xff]
        %v415 = vld [vmem:[#allocation2 + $0xb0] sm:$0xff]
        %v416 = vld [vmem:[#allocation2 + $0xb8] sm:$0xff]
        %v417 = vld [vmem:[#allocation2 + $0xc0] sm:$0xff]
        %v418 = vld [vmem:[#allocation2 + $0xc8] sm:$0xff]
        %v419 = vld [vmem:[#allocation2 + $0xd0] sm:$0xff]
        %v420 = vld [vmem:[#allocation2 + $0xd8] sm:$0xff]
        %v421 = vld [vmem:[#allocation2 + $0xe0] sm:$0xff]
        %v422 = vld [vmem:[#allocation2 + $0xe8] sm:$0xff]
        %v423 = vld [vmem:[#allocation2 + $0xf0] sm:$0xff]
        %v424 = vld [vmem:[#allocation2 + $0xf8] sm:$0xff]
        %v425 = vld [vmem:[#allocation2 + $0x100] sm:$0xff]
        %v426 = vld [vmem:[#allocation2 + $0x108] sm:$0xff]
        %v427 = vld [vmem:[#allocation2 + $0x110] sm:$0xff]
        %v428 = vld [vmem:[#allocation2 + $0x118] sm:$0xff]
        %v429 = vld [vmem:[#allocation2 + $0x120] sm:$0xff]
        %v430 = vld [vmem:[#allocation2 + $0x128] sm:$0xff]
        %v431 = vld [vmem:[#allocation2 + $0x130] sm:$0xff]
        %v432 = vld [vmem:[#allocation2 + $0x138] sm:$0xff]
        %433 = vxpose.xlu0.b32.start [1/16] %v361, 128
        %434 = vxpose.xlu0.b32.cont [2/16] %v363, 128
        %435 = vxpose.xlu0.b32.cont [3/16] %v365, 128
        %436 = vxpose.xlu0.b32.cont [4/16] %v367, 128
        %437 = vxpose.xlu0.b32.cont [5/16] %v369, 128
        %438 = vxpose.xlu0.b32.cont [6/16] %v371, 128
        %439 = vxpose.xlu0.b32.cont [7/16] %v373, 128
        %440 = vxpose.xlu0.b32.cont [8/16] %v375, 128
        %441 = vxpose.xlu0.b32.cont [9/16] %v377, 128
        %442 = vxpose.xlu0.b32.cont [10/16] %v379, 128
        %443 = vxpose.xlu0.b32.cont [11/16] %v381, 128
        %444 = vxpose.xlu0.b32.cont [12/16] %v383, 128
        %445 = vxpose.xlu0.b32.cont [13/16] %v385, 128
        %446 = vxpose.xlu0.b32.cont [14/16] %v387, 128
        %447 = vxpose.xlu0.b32.cont [15/16] %v389, 128
        %448 = vxpose.xlu0.b32.end [16/16] %v391, 128
        %v449 = vpop.trf.xlu0
        %v450 = vpop.trf.xlu0
        %v451 = vpop.trf.xlu0
        %v452 = vpop.trf.xlu0
        %v453 = vpop.trf.xlu0
        %v454 = vpop.trf.xlu0
        %v455 = vpop.trf.xlu0
        %v456 = vpop.trf.xlu0
        %v457 = vpop.trf.xlu0
        %v458 = vpop.trf.xlu0
        %v459 = vpop.trf.xlu0
        %v460 = vpop.trf.xlu0
        %v461 = vpop.trf.xlu0
        %v462 = vpop.trf.xlu0
        %v463 = vpop.trf.xlu0
        %v464 = vpop.trf.xlu0
        %465 = vxpose.xlu0.b32.start [1/16] %v362, 128
        %466 = vxpose.xlu0.b32.cont [2/16] %v364, 128
        %467 = vxpose.xlu0.b32.cont [3/16] %v366, 128
        %468 = vxpose.xlu0.b32.cont [4/16] %v368, 128
        %469 = vxpose.xlu0.b32.cont [5/16] %v370, 128
        %470 = vxpose.xlu0.b32.cont [6/16] %v372, 128
        %471 = vxpose.xlu0.b32.cont [7/16] %v374, 128
        %472 = vxpose.xlu0.b32.cont [8/16] %v376, 128
        %473 = vxpose.xlu0.b32.cont [9/16] %v378, 128
        %474 = vxpose.xlu0.b32.cont [10/16] %v380, 128
        %475 = vxpose.xlu0.b32.cont [11/16] %v382, 128
        %476 = vxpose.xlu0.b32.cont [12/16] %v384, 128
        %477 = vxpose.xlu0.b32.cont [13/16] %v386, 128
        %478 = vxpose.xlu0.b32.cont [14/16] %v388, 128
        %479 = vxpose.xlu0.b32.cont [15/16] %v390, 128
        %480 = vxpose.xlu0.b32.end [16/16] %v392, 128
        %v481 = vpop.trf.xlu0
        %v482 = vpop.trf.xlu0
        %v483 = vpop.trf.xlu0
        %v484 = vpop.trf.xlu0
        %v485 = vpop.trf.xlu0
        %v486 = vpop.trf.xlu0
        %v487 = vpop.trf.xlu0
        %v488 = vpop.trf.xlu0
        %v489 = vpop.trf.xlu0
        %v490 = vpop.trf.xlu0
        %v491 = vpop.trf.xlu0
        %v492 = vpop.trf.xlu0
        %v493 = vpop.trf.xlu0
        %v494 = vpop.trf.xlu0
        %v495 = vpop.trf.xlu0
        %v496 = vpop.trf.xlu0
        %497 = vmatprep.subr.mxu0 %v362
        %498 = vmatpush1.msra.mxu0 %v361
        %499 = vmatprep.subr.mxu0 %v364
        %500 = vmatpush1.msra.mxu0 %v363
        %501 = vmatprep.subr.mxu0 %v366
        %502 = vmatpush1.msra.mxu0 %v365
        %503 = vmatprep.subr.mxu0 %v368
        %504 = vmatpush1.msra.mxu0 %v367
        %505 = vmatprep.subr.mxu0 %v370
        %506 = vmatpush1.msra.mxu0 %v369
        %507 = vmatprep.subr.mxu0 %v372
        %508 = vmatpush1.msra.mxu0 %v371
        %509 = vmatprep.subr.mxu0 %v374
        %510 = vmatpush1.msra.mxu0 %v373
        %511 = vmatprep.subr.mxu0 %v376
        %512 = vmatpush1.msra.mxu0 %v375
        %513 = vmatprep.subr.mxu0 %v378
        %514 = vmatpush1.msra.mxu0 %v377
        %515 = vmatprep.subr.mxu0 %v380
        %516 = vmatpush1.msra.mxu0 %v379
        %517 = vmatprep.subr.mxu0 %v382
        %518 = vmatpush1.msra.mxu0 %v381
        %519 = vmatprep.subr.mxu0 %v384
        %520 = vmatpush1.msra.mxu0 %v383
        %521 = vmatprep.subr.mxu0 %v386
        %522 = vmatpush1.msra.mxu0 %v385
        %523 = vmatprep.subr.mxu0 %v388
        %524 = vmatpush1.msra.mxu0 %v387
        %525 = vmatprep.subr.mxu0 %v390
        %526 = vmatpush1.msra.mxu0 %v389
        %527 = vmatprep.subr.mxu0 %v392
        %528 = vmatpush1.msra.mxu0 %v391
        %529 = vmatprep.subr.mxu0 0.0
        %530 = vmatpush1.msra.mxu0 0.0
        %531 = vmatprep.subr.mxu0 0.0
        %532 = vmatpush1.msra.mxu0 0.0
        %533 = vmatprep.subr.mxu0 0.0
        %534 = vmatpush1.msra.mxu0 0.0
        %535 = vmatprep.subr.mxu0 0.0
        %536 = vmatpush1.msra.mxu0 0.0
        %537 = vmatprep.subr.mxu0 0.0
        %538 = vmatpush1.msra.mxu0 0.0
        %539 = vmatprep.subr.mxu0 0.0
        %540 = vmatpush1.msra.mxu0 0.0
        %541 = vmatprep.subr.mxu0 0.0
        %542 = vmatpush1.msra.mxu0 0.0
        %543 = vmatprep.subr.mxu0 0.0
        %544 = vmatpush1.msra.mxu0 0.0
        %545 = vmatprep.subr.mxu0 0.0
        %546 = vmatpush1.msra.mxu0 0.0
        %547 = vmatprep.subr.mxu0 0.0
        %548 = vmatpush1.msra.mxu0 0.0
        %549 = vmatprep.subr.mxu0 0.0
        %550 = vmatpush1.msra.mxu0 0.0
        %551 = vmatprep.subr.mxu0 0.0
        %552 = vmatpush1.msra.mxu0 0.0
        %553 = vmatprep.subr.mxu0 0.0
        %554 = vmatpush1.msra.mxu0 0.0
        %555 = vmatprep.subr.mxu0 0.0
        %556 = vmatpush1.msra.mxu0 0.0
        %557 = vmatprep.subr.mxu0 0.0
        %558 = vmatpush1.msra.mxu0 0.0
        %559 = vmatprep.subr.mxu0 0.0
        %560 = vmatpush1.msra.mxu0 0.0
        %561 = vmatprep.mubr.f32.mxu0 0.0
        %562 = vmatmul.mubr.f32.gmra.mrb[0].mxu0 %v449
        %v563 = vpop.f32.mrb[0].mxu0
        %v564 = vadd.f32 0.0, %v563
        %v565 = vpop.f32.mrb[0].mxu0
        %v566 = vadd.f32 0.0, %v565
        %567 = vmatprep.mubr.f32.mxu0 0.0
        %568 = vmatmul.mubr.f32.gmra.mrb[0].mxu0 %v450
        %v569 = vpop.f32.mrb[0].mxu0
        %v570 = vadd.f32 0.0, %v569
        %v571 = vpop.f32.mrb[0].mxu0
        %v572 = vadd.f32 0.0, %v571
        %573 = vmatprep.mubr.f32.mxu0 0.0
        %574 = vmatmul.mubr.f32.gmra.mrb[0].mxu0 %v451
        %v575 = vpop.f32.mrb[0].mxu0
        %v576 = vadd.f32 0.0, %v575
        %v577 = vpop.f32.mrb[0].mxu0
        %v578 = vadd.f32 0.0, %v577
        %579 = vmatprep.mubr.f32.mxu0 0.0
        %580 = vmatmul.mubr.f32.gmra.mrb[0].mxu0 %v452
        %v581 = vpop.f32.mrb[0].mxu0
        %v582 = vadd.f32 0.0, %v581
        %v583 = vpop.f32.mrb[0].mxu0
        %v584 = vadd.f32 0.0, %v583
        %585 = vmatprep.mubr.f32.mxu0 0.0
        %586 = vmatmul.mubr.f32.gmra.mrb[0].mxu0 %v453
        %v587 = vpop.f32.mrb[0].mxu0
        %v588 = vadd.f32 0.0, %v587
        %v589 = vpop.f32.mrb[0].mxu0
        %v590 = vadd.f32 0.0, %v589
        %591 = vmatprep.mubr.f32.mxu0 0.0
        %592 = vmatmul.mubr.f32.gmra.mrb[0].mxu0 %v454
        %v593 = vpop.f32.mrb[0].mxu0
        %v594 = vadd.f32 0.0, %v593
        %v595 = vpop.f32.mrb[0].mxu0
        %v596 = vadd.f32 0.0, %v595
        %597 = vmatprep.mubr.f32.mxu0 0.0
        %598 = vmatmul.mubr.f32.gmra.mrb[0].mxu0 %v455
        %v599 = vpop.f32.mrb[0].mxu0
        %v600 = vadd.f32 0.0, %v599
        %v601 = vpop.f32.mrb[0].mxu0
        %v602 = vadd.f32 0.0, %v601
        %603 = vmatprep.mubr.f32.mxu0 0.0
        %604 = vmatmul.mubr.f32.gmra.mrb[0].mxu0 %v456
        %v605 = vpop.f32.mrb[0].mxu0
        %v606 = vadd.f32 0.0, %v605
        %v607 = vpop.f32.mrb[0].mxu0
        %v608 = vadd.f32 0.0, %v607
        %609 = vmatprep.mubr.f32.mxu0 0.0
        %610 = vmatmul.mubr.f32.gmra.mrb[0].mxu0 %v457
        %v611 = vpop.f32.mrb[0].mxu0
        %v612 = vadd.f32 0.0, %v611
        %v613 = vpop.f32.mrb[0].mxu0
        %v614 = vadd.f32 0.0, %v613
        %615 = vmatprep.mubr.f32.mxu0 0.0
        %616 = vmatmul.mubr.f32.gmra.mrb[0].mxu0 %v458
        %v617 = vpop.f32.mrb[0].mxu0
        %v618 = vadd.f32 0.0, %v617
        %v619 = vpop.f32.mrb[0].mxu0
        %v620 = vadd.f32 0.0, %v619
        %621 = vmatprep.mubr.f32.mxu0 0.0
        %622 = vmatmul.mubr.f32.gmra.mrb[0].mxu0 %v459
        %v623 = vpop.f32.mrb[0].mxu0
        %v624 = vadd.f32 0.0, %v623
        %v625 = vpop.f32.mrb[0].mxu0
        %v626 = vadd.f32 0.0, %v625
        %627 = vmatprep.mubr.f32.mxu0 0.0
        %628 = vmatmul.mubr.f32.gmra.mrb[0].mxu0 %v460
        %v629 = vpop.f32.mrb[0].mxu0
        %v630 = vadd.f32 0.0, %v629
        %v631 = vpop.f32.mrb[0].mxu0
        %v632 = vadd.f32 0.0, %v631
        %633 = vmatprep.mubr.f32.mxu0 0.0
        %634 = vmatmul.mubr.f32.gmra.mrb[0].mxu0 %v461
        %v635 = vpop.f32.mrb[0].mxu0
        %v636 = vadd.f32 0.0, %v635
        %v637 = vpop.f32.mrb[0].mxu0
        %v638 = vadd.f32 0.0, %v637
        %639 = vmatprep.mubr.f32.mxu0 0.0
        %640 = vmatmul.mubr.f32.gmra.mrb[0].mxu0 %v462
        %v641 = vpop.f32.mrb[0].mxu0
        %v642 = vadd.f32 0.0, %v641
        %v643 = vpop.f32.mrb[0].mxu0
        %v644 = vadd.f32 0.0, %v643
        %645 = vmatprep.mubr.f32.mxu0 0.0
        %646 = vmatmul.mubr.f32.gmra.mrb[0].mxu0 %v463
        %v647 = vpop.f32.mrb[0].mxu0
        %v648 = vadd.f32 0.0, %v647
        %v649 = vpop.f32.mrb[0].mxu0
        %v650 = vadd.f32 0.0, %v649
        %651 = vmatprep.mubr.f32.mxu0 0.0
        %652 = vmatmul.mubr.f32.gmra.mrb[0].mxu0 %v464
        %v653 = vpop.f32.mrb[0].mxu0
        %v654 = vadd.f32 0.0, %v653
        %v655 = vpop.f32.mrb[0].mxu0
        %v656 = vadd.f32 0.0, %v655
        %657 = vmatprep.mubr.f32.mxu0 0.0
        %658 = vmatmul.mubr.f32.gmra.mrb[0].mxu0 %v481
        %v659 = vpop.f32.mrb[0].mxu0
        %v660 = vadd.f32 0.0, %v659
        %v661 = vpop.f32.mrb[0].mxu0
        %v662 = vadd.f32 0.0, %v661
        %663 = vmatprep.mubr.f32.mxu0 0.0
        %664 = vmatmul.mubr.f32.gmra.mrb[0].mxu0 %v482
        %v665 = vpop.f32.mrb[0].mxu0
        %v666 = vadd.f32 0.0, %v665
        %v667 = vpop.f32.mrb[0].mxu0
        %v668 = vadd.f32 0.0, %v667
        %669 = vmatprep.mubr.f32.mxu0 0.0
        %670 = vmatmul.mubr.f32.gmra.mrb[0].mxu0 %v483
        %v671 = vpop.f32.mrb[0].mxu0
        %v672 = vadd.f32 0.0, %v671
        %v673 = vpop.f32.mrb[0].mxu0
        %v674 = vadd.f32 0.0, %v673
        %675 = vmatprep.mubr.f32.mxu0 0.0
        %676 = vmatmul.mubr.f32.gmra.mrb[0].mxu0 %v484
        %v677 = vpop.f32.mrb[0].mxu0
        %v678 = vadd.f32 0.0, %v677
        %v679 = vpop.f32.mrb[0].mxu0
        %v680 = vadd.f32 0.0, %v679
        %681 = vdwg.mxu0
        %v682 = vadd.f32 %v393, %v564
        %v683 = vadd.f32 %v394, %v566
        %v684 = vadd.f32 %v395, %v570
        %v685 = vadd.f32 %v396, %v572
        %v686 = vadd.f32 %v397, %v576
        %v687 = vadd.f32 %v398, %v578
        %v688 = vadd.f32 %v399, %v582
        %v689 = vadd.f32 %v400, %v584
        %v690 = vadd.f32 %v401, %v588
        %v691 = vadd.f32 %v402, %v590
        %v692 = vadd.f32 %v403, %v594
        %v693 = vadd.f32 %v404, %v596
        %v694 = vadd.f32 %v405, %v600
        %v695 = vadd.f32 %v406, %v602
        %v696 = vadd.f32 %v407, %v606
        %v697 = vadd.f32 %v408, %v608
        %v698 = vadd.f32 %v409, %v612
        %v699 = vadd.f32 %v410, %v614
        %v700 = vadd.f32 %v411, %v618
        %v701 = vadd.f32 %v412, %v620
        %v702 = vadd.f32 %v413, %v624
        %v703 = vadd.f32 %v414, %v626
        %v704 = vadd.f32 %v415, %v630
        %v705 = vadd.f32 %v416, %v632
        %v706 = vadd.f32 %v417, %v636
        %v707 = vadd.f32 %v418, %v638
        %v708 = vadd.f32 %v419, %v642
        %v709 = vadd.f32 %v420, %v644
        %v710 = vadd.f32 %v421, %v648
        %v711 = vadd.f32 %v422, %v650
        %v712 = vadd.f32 %v423, %v654
        %v713 = vadd.f32 %v424, %v656
        %v714 = vadd.f32 %v425, %v660
        %v715 = vadd.f32 %v426, %v662
        %v716 = vadd.f32 %v427, %v666
        %v717 = vadd.f32 %v428, %v668
        %v718 = vadd.f32 %v429, %v672
        %v719 = vadd.f32 %v430, %v674
        %v720 = vadd.f32 %v431, %v678
        %v721 = vadd.f32 %v432, %v680
        %722 = vst [vmem:[#allocation2] sm:$0xff] %v682
        %vm723 = vcmask 261120
        %724 = vst.msk [vmem:[#allocation2 + $0x8] sm:$0xff] %vm723, %v683
        %725 = vst [vmem:[#allocation2 + $0x10] sm:$0xff] %v684
        %726 = vst.msk [vmem:[#allocation2 + $0x18] sm:$0xff] %vm723, %v685
        %727 = vst [vmem:[#allocation2 + $0x20] sm:$0xff] %v686
        %728 = vst.msk [vmem:[#allocation2 + $0x28] sm:$0xff] %vm723, %v687
        %729 = vst [vmem:[#allocation2 + $0x30] sm:$0xff] %v688
        %730 = vst.msk [vmem:[#allocation2 + $0x38] sm:$0xff] %vm723, %v689
        %731 = vst [vmem:[#allocation2 + $0x40] sm:$0xff] %v690
        %732 = vst.msk [vmem:[#allocation2 + $0x48] sm:$0xff] %vm723, %v691
        %733 = vst [vmem:[#allocation2 + $0x50] sm:$0xff] %v692
        %734 = vst.msk [vmem:[#allocation2 + $0x58] sm:$0xff] %vm723, %v693
        %735 = vst [vmem:[#allocation2 + $0x60] sm:$0xff] %v694
        %736 = vst.msk [vmem:[#allocation2 + $0x68] sm:$0xff] %vm723, %v695
        %737 = vst [vmem:[#allocation2 + $0x70] sm:$0xff] %v696
        %738 = vst.msk [vmem:[#allocation2 + $0x78] sm:$0xff] %vm723, %v697
        %739 = vst [vmem:[#allocation2 + $0x80] sm:$0xff] %v698
        %740 = vst.msk [vmem:[#allocation2 + $0x88] sm:$0xff] %vm723, %v699
        %741 = vst [vmem:[#allocation2 + $0x90] sm:$0xff] %v700
        %742 = vst.msk [vmem:[#allocation2 + $0x98] sm:$0xff] %vm723, %v701
        %743 = vst [vmem:[#allocation2 + $0xa0] sm:$0xff] %v702
        %744 = vst.msk [vmem:[#allocation2 + $0xa8] sm:$0xff] %vm723, %v703
        %745 = vst [vmem:[#allocation2 + $0xb0] sm:$0xff] %v704
        %746 = vst.msk [vmem:[#allocation2 + $0xb8] sm:$0xff] %vm723, %v705
        %747 = vst [vmem:[#allocation2 + $0xc0] sm:$0xff] %v706
        %748 = vst.msk [vmem:[#allocation2 + $0xc8] sm:$0xff] %vm723, %v707
        %749 = vst [vmem:[#allocation2 + $0xd0] sm:$0xff] %v708
        %750 = vst.msk [vmem:[#allocation2 + $0xd8] sm:$0xff] %vm723, %v709
        %751 = vst [vmem:[#allocation2 + $0xe0] sm:$0xff] %v710
        %752 = vst.msk [vmem:[#allocation2 + $0xe8] sm:$0xff] %vm723, %v711
        %753 = vst [vmem:[#allocation2 + $0xf0] sm:$0xff] %v712
        %754 = vst.msk [vmem:[#allocation2 + $0xf8] sm:$0xff] %vm723, %v713
        %755 = vst [vmem:[#allocation2 + $0x100] sm:$0xff] %v714
        %756 = vst.msk [vmem:[#allocation2 + $0x108] sm:$0xff] %vm723, %v715
        %757 = vst [vmem:[#allocation2 + $0x110] sm:$0xff] %v716
        %758 = vst.msk [vmem:[#allocation2 + $0x118] sm:$0xff] %vm723, %v717
        %759 = vst [vmem:[#allocation2 + $0x120] sm:$0xff] %v718
        %760 = vst.msk [vmem:[#allocation2 + $0x128] sm:$0xff] %vm723, %v719
        %761 = vst [vmem:[#allocation2 + $0x130] sm:$0xff] %v720
        %762 = vst.msk [vmem:[#allocation2 + $0x138] sm:$0xff] %vm723, %v721
        %v763 = vld [vmem:[#allocation4] sm:$0x3]
        %v764 = vadd.f32 %v361, %v363
        %v765 = vadd.f32 %v764, %v365
        %v766 = vadd.f32 %v765, %v367
        %v767 = vadd.f32 %v766, %v369
        %v768 = vadd.f32 %v767, %v371
        %v769 = vadd.f32 %v768, %v373
        %v770 = vadd.f32 %v769, %v375
        %v771 = vadd.f32 %v770, %v377
        %v772 = vadd.f32 %v771, %v379
        %v773 = vadd.f32 %v772, %v381
        %v774 = vadd.f32 %v773, %v383
        %v775 = vadd.f32 %v774, %v385
        %v776 = vadd.f32 %v775, %v387
        %v777 = vadd.f32 %v776, %v389
        %v778 = vadd.f32 %v777, %v391
        %v779 = vrot.slane %v778, 4
        %v780 = vadd.f32 %v778, %v779
        %v781 = vrot.slane %v780, 2
        %v782 = vadd.f32 %v780, %v781
        %v783 = vrot.slane %v782, 1
        %v784 = vadd.f32 %v782, %v783
        %v785 = vsel %vm723, %v362, 0.0
        %v786 = vsel %vm723, %v364, 0.0
        %v787 = vadd.f32 %v785, %v786
        %v788 = vsel %vm723, %v366, 0.0
        %v789 = vadd.f32 %v787, %v788
        %v790 = vsel %vm723, %v368, 0.0
        %v791 = vadd.f32 %v789, %v790
        %v792 = vsel %vm723, %v370, 0.0
        %v793 = vadd.f32 %v791, %v792
        %v794 = vsel %vm723, %v372, 0.0
        %v795 = vadd.f32 %v793, %v794
        %v796 = vsel %vm723, %v374, 0.0
        %v797 = vadd.f32 %v795, %v796
        %v798 = vsel %vm723, %v376, 0.0
        %v799 = vadd.f32 %v797, %v798
        %v800 = vsel %vm723, %v378, 0.0
        %v801 = vadd.f32 %v799, %v800
        %v802 = vsel %vm723, %v380, 0.0
        %v803 = vadd.f32 %v801, %v802
        %v804 = vsel %vm723, %v382, 0.0
        %v805 = vadd.f32 %v803, %v804
        %v806 = vsel %vm723, %v384, 0.0
        %v807 = vadd.f32 %v805, %v806
        %v808 = vsel %vm723, %v386, 0.0
        %v809 = vadd.f32 %v807, %v808
        %v810 = vsel %vm723, %v388, 0.0
        %v811 = vadd.f32 %v809, %v810
        %v812 = vsel %vm723, %v390, 0.0
        %v813 = vadd.f32 %v811, %v812
        %v814 = vsel %vm723, %v392, 0.0
        %v815 = vadd.f32 %v813, %v814
        %v816 = vrot.slane %v815, 4
        %v817 = vadd.f32 %v815, %v816
        %v818 = vrot.slane %v817, 2
        %v819 = vadd.f32 %v817, %v818
        %v820 = vrot.slane %v819, 1
        %v821 = vadd.f32 %v819, %v820
        %v824 = vcombine.low %v784, %v821
        %v826 = vunpack.c.l.s4 1966171168
        %v827 = vunpack.c.0.s8 %v826
        %v828 = vlaneseq
        %v829 = vshrl.u32 %v828, 7
        %v830 = vsub.s32 %v827, %v829
        %v831 = vrot.slane %v824, %v830
        %v833 = vunpack.c.l.s4 1966171168
        %v834 = vunpack.c.0.s8 %v833
        %v835 = vlaneseq
        %v836 = vshrl.u32 %v835, 7
        %v837 = vsub.s32 %v834, %v836
        %v838 = vrot.slane %v831, %v837
        %v840 = vadd.f32 %v763, %v838
        %v841 = vlaneseq
        %vm842 = vcmp.ge.s32.totalorder %v841, 0
        %vm843 = vcmp.lt.s32.totalorder %v841, 160
        %vm844 = vmand %vm842, %vm843
        %845 = vst.msk [vmem:[#allocation4] sm:$0x3] %vm844, %v840
        // Predicated region
        $region29: #{tpu_custom_call.1} parent=23 // pred_check
          %p846 = pneg %p80
        $region30: #{tpu_custom_call.1} parent=23 // pred_check_branch
          %848 = sbr.rel (%p846) target = $region32
        $region31: #{tpu_custom_call.1} parent=23 // pred_region
          %s850 = ssub.s32 5120, 5120
          %851 = vsyncadd [#allocation3], %s850
          %s852 = smul.addr %s20, 40
          %s853 = smul.addr %s852, 128
          %s854 = scalar_lea.hbm %s1, %s853
          %s855 = sshll.u32 [#allocation2], 4
          %s856 = int_to_ptr.vmem [resolvable:$true] %s855
          %861 = dma.vmem_to_hbm [thread:$0]  %s856, 5120, %s854, [#allocation3], 256, 256, 16
        $region32: #{tpu_custom_call.1} parent=23 // pred_fallthru
          _
        // Predicated region
        $region33: #{tpu_custom_call.1} parent=23 // pred_check
          %p862 = pneg %p106
        $region34: #{tpu_custom_call.1} parent=23 // pred_check_branch
          %864 = sbr.rel (%p862) target = $region36
        $region35: #{tpu_custom_call.1} parent=23 // pred_region
          %s866 = ssub.s32 32, 32
          %867 = vsyncadd [#allocation5], %s866
          %s868 = smul.addr %s20, 2
          %s869 = smul.addr %s868, 16
          %s870 = scalar_lea.hbm %s2, %s869
          %s872 = sshll.u32 [#allocation4], 4
          %s873 = int_to_ptr.vmem [resolvable:$true] %s872
          %875 = dma.vmem_to_hbm [thread:$0]  %s873, 32, %s870, [#allocation5]
        $region36: #{tpu_custom_call.1} parent=23 // pred_fallthru
          _
        // Predicated region
        $region37: #{tpu_custom_call.1} parent=23 // pred_check
          %p876 = pneg %p80
        $region38: #{tpu_custom_call.1} parent=23 // pred_check_branch
          %878 = sbr.rel (%p876) target = $region40
        $region39: #{tpu_custom_call.1} parent=23 // pred_region
          %879 = dma.done [#allocation3], 5120
        $region40: #{tpu_custom_call.1} parent=23 // pred_fallthru
          _
        // Predicated region
        $region41: #{tpu_custom_call.1} parent=23 // pred_check
          %p880 = pneg %p106
        $region42: #{tpu_custom_call.1} parent=23 // pred_check_branch
          %882 = sbr.rel (%p880) target = $region44
        $region43: #{tpu_custom_call.1} parent=23 // pred_region
          %883 = dma.done [#allocation5], 32
        $region44: #{tpu_custom_call.1} parent=23 // pred_fallthru
          _
      $region24: #{tpu_custom_call.1} parent=5 // pred_fallthru
        _
      %p884 = scmp.le.s32.totalorder 2, %s11
      // Predicated region
      $region45: #{tpu_custom_call.1} parent=5 // pred_check
        %p885 = pneg %p884
      $region46: #{tpu_custom_call.1} parent=5 // pred_check_branch
        %887 = sbr.rel (%p885) target = $region48
      $region47: #{tpu_custom_call.1} parent=5 // pred_region
        %s888 = ssub.s32 %s11, 2
      $region48: #{tpu_custom_call.1} parent=5 // pred_fallthru
        _
    $region6: #{tpu_custom_call.1} parent=1 // loop_footer
      %s15 = sadd.s32 1, %s11
    $region7: #{tpu_custom_call.1} parent=1 // loop_footer_branch
      %10 = sbr.rel target = $region3
    $region8: #{tpu_custom_call.1} parent=1 // loop_exit
      _
    %889 = vsyncpa [#allocation3], 1
    %s890 = scalar_lea.sflag [#allocation3], 1
    %891 = vsyncpa %s890, 1
    %892 = vsyncpa [#allocation5], 1

</llo_original>
